<compile_context>
chip_gen: v6e
topology: v6e:2x2x1
jax: 0.10.0
libtpu: 0.0.40
codegen_flags: <defaults>
</compile_context>

<pallas_src>
import jax
import jax.numpy as jnp
from jax.experimental import pallas as pl
from jax.experimental.pallas import tpu as pltpu


def attention_kernel(x_ref, w_ref, b_ref, o_ref):
    # x_ref: (Bb, T, H) VMEM slab of lstm_out for the current batch block
    # w_ref: (1, H)     VMEM-resident Linear weight row (torch shape (1, H))
    # b_ref: (1, 1)     scalar bias
    # o_ref: (Bb, H)    context output rows (sublane/lane dense)
    x = x_ref[...].astype(jnp.float32)                  # (Bb, T, H)
    w = w_ref[...].astype(jnp.float32)                  # (1, H)
    b = b_ref[0, 0].astype(jnp.float32)                 # scalar

    # scores = x @ w.T + b computed as VPU multiply + lane (H) reduce,
    # result is lane-dense (Bb, T) — avoids an N=1 MXU matmul.
    scores = jnp.sum(x * w[None, :, :], axis=-1) + b    # (Bb, T)

    # Numerically stable softmax over T; normalization folded into final scale.
    m = jnp.max(scores, axis=-1, keepdims=True)         # (Bb, 1)
    e = jnp.exp(scores - m)                              # (Bb, T)
    denom = jnp.sum(e, axis=-1, keepdims=True)           # (Bb, 1)

    # Unnormalized context: sum over T of e * x  -> (Bb, H), f32 accumulation.
    ctx = jnp.sum(e[:, :, None] * x, axis=1)             # (Bb, H)

    # Exact normalization: one divide per row, then a broadcast multiply.
    inv = 1.0 / denom                                     # (Bb, 1)
    o_ref[...] = (ctx * inv).astype(o_ref.dtype)


def _pick_batch_block(B, T, H, itemsize):
    """Choose how many batch rows to process per grid step."""
    # Keep the (double-buffered) input slab well under the default scoped VMEM
    # on every chip generation (v5e 16 MiB, v6e/v7x 32 MiB).
    budget = 8 * 1024 * 1024
    per_row = max(1, T * H * itemsize)
    bb = max(1, min(B, budget // per_row))
    if bb >= 8:
        bb = (bb // 8) * 8                               # sublane-dense output rows
    # TODO(synk): for very long T*H add a T grid axis with an online-softmax
    # (m, l, acc) accumulator instead of requiring a whole (bb, T, H) slab.
    return bb


def attention_forward(lstm_out, weight, bias):
    """lstm_out: (B, T, H); weight: (1, H) as in torch nn.Linear(H, 1); bias: (1,)."""
    B, T, H = lstm_out.shape
    itemsize = jnp.dtype(lstm_out.dtype).itemsize
    bb = _pick_batch_block(B, T, H, itemsize)
    grid = (pl.cdiv(B, bb),)

    w_row = weight.reshape(1, H).astype(jnp.float32)     # (1, H)
    b_arr = bias.reshape(1, 1).astype(jnp.float32)       # (1, 1)

    cost = pl.CostEstimate(
        flops=4 * B * T * H,                             # scores + weighted sum
        transcendentals=B * T,                           # exp
        bytes_accessed=B * T * H * itemsize + B * H * itemsize + H * 4 + 4,
    )

    return pl.pallas_call(
        attention_kernel,
        out_shape=jax.ShapeDtypeStruct((B, H), lstm_out.dtype),
        grid_spec=pltpu.PrefetchScalarGridSpec(
            num_scalar_prefetch=0,
            grid=grid,
            in_specs=[
                pl.BlockSpec((bb, T, H), lambda i: (i, 0, 0)),   # batched slab
                pl.BlockSpec((1, H), lambda i: (0, 0)),          # resident weight
                pl.BlockSpec((1, 1), lambda i: (0, 0)),          # scalar bias
            ],
            out_specs=pl.BlockSpec((bb, H), lambda i: (i, 0)),
        ),
        compiler_params=pltpu.CompilerParams(
            dimension_semantics=("parallel",),
        ),
        cost_estimate=cost,
    )(lstm_out, w_row, b_arr)


def attention_reference(lstm_out, weight, bias):
    scores = jnp.einsum("bth,oh->bto", lstm_out, weight) + bias   # (B, T, 1)
    attn = jax.nn.softmax(scores, axis=1)
    return jnp.sum(attn * lstm_out, axis=1)                        # (B, H)


if __name__ == "__main__":
    key = jax.random.PRNGKey(0)
    k_x, k_w, k_b = jax.random.split(key, 3)

    B, T, H = 2, 8, 32   # batch, seq, hidden

    lstm_out = jax.random.normal(k_x, (B, T, H), dtype=jnp.float32)

    # nn.Linear(H, 1) parameter shapes: weight (1, H), bias (1,)
    bound = 1.0 / (H ** 0.5)
    weight = jax.random.uniform(k_w, (1, H), jnp.float32, -bound, bound)
    bias = jax.random.uniform(k_b, (1,), jnp.float32, -bound, bound)

    out = attention_forward(lstm_out, weight, bias)
    out = jax.block_until_ready(out)

    ref = attention_reference(lstm_out, weight, bias)
    assert out.shape == (B, H)
    assert jnp.allclose(out, ref, atol=1e-4, rtol=1e-4), "mismatch vs reference"

    print("KERNEL_OK")
</pallas_src>

<mosaic_0001>
module attributes {stable_mosaic.version = 11 : i64} {
  func.func @attention_kernel(%arg0: i32, %arg1: memref<2x8x32xf32, #tpu.memory_space<vmem>>, %arg2: memref<1x32xf32, #tpu.memory_space<vmem>>, %arg3: memref<1x1xf32, #tpu.memory_space<vmem>>, %arg4: memref<2x32xf32, #tpu.memory_space<vmem>>) attributes {dimension_semantics = [#tpu.dimension_semantics<parallel>], iteration_bounds = array<i64: 1>, scalar_prefetch = 0 : i64, scratch_operands = 0 : i64, tpu.core_type = #tpu.core_type<tc>, window_params = [{transform_indices = @transform_0, window_bounds = array<i64: 2, 8, 32>}, {pipeline_mode = #tpu.pipeline_mode<synchronous>, transform_indices = @transform_1, window_bounds = array<i64: 1, 32>}, {pipeline_mode = #tpu.pipeline_mode<synchronous>, transform_indices = @transform_2, window_bounds = array<i64: 1, 1>}, {transform_indices = @transform_3, window_bounds = array<i64: 2, 32>}]} {
    %c0 = arith.constant 0 : index
    %c0_0 = arith.constant 0 : index
    %c0_1 = arith.constant 0 : index
    %0 = vector.load %arg1[%c0, %c0_0, %c0_1] : memref<2x8x32xf32, #tpu.memory_space<vmem>>, vector<2x8x32xf32>
    %c0_2 = arith.constant 0 : index
    %c0_3 = arith.constant 0 : index
    %1 = vector.load %arg2[%c0_2, %c0_3] : memref<1x32xf32, #tpu.memory_space<vmem>>, vector<1x32xf32>
    %c0_4 = arith.constant 0 : index
    %c0_5 = arith.constant 0 : index
    %2 = vector.load %arg3[%c0_4, %c0_5] : memref<1x1xf32, #tpu.memory_space<vmem>>, vector<1x1xf32>
    %3 = vector.extract %2[0, 0] : f32 from vector<1x1xf32>
    %4 = vector.shape_cast %1 : vector<1x32xf32> to vector<1x1x32xf32>
    %5 = vector.broadcast %4 : vector<1x1x32xf32> to vector<2x8x32xf32>
    %6 = arith.mulf %0, %5 : vector<2x8x32xf32>
    %cst = arith.constant dense<0.000000e+00> : vector<2x8xf32>
    %7 = vector.multi_reduction <add>, %6, %cst [2] : vector<2x8x32xf32> to vector<2x8xf32>
    %8 = vector.broadcast %3 : f32 to vector<2x8xf32>
    %9 = arith.addf %7, %8 : vector<2x8xf32>
    %cst_6 = arith.constant dense<0xFF800000> : vector<2xf32>
    %10 = vector.multi_reduction <maximumf>, %9, %cst_6 [1] : vector<2x8xf32> to vector<2xf32>
    %11 = vector.shape_cast %10 : vector<2xf32> to vector<2x1xf32>
    %12 = vector.broadcast %11 : vector<2x1xf32> to vector<2x8xf32>
    %13 = arith.subf %9, %12 : vector<2x8xf32>
    %14 = math.exp %13 : vector<2x8xf32>
    %cst_7 = arith.constant dense<0.000000e+00> : vector<2xf32>
    %15 = vector.multi_reduction <add>, %14, %cst_7 [1] : vector<2x8xf32> to vector<2xf32>
    %16 = vector.shape_cast %15 : vector<2xf32> to vector<2x1xf32>
    %17 = vector.shape_cast %14 : vector<2x8xf32> to vector<2x8x1xf32>
    %18 = vector.broadcast %17 : vector<2x8x1xf32> to vector<2x8x32xf32>
    %19 = arith.mulf %18, %0 : vector<2x8x32xf32>
    %cst_8 = arith.constant dense<0.000000e+00> : vector<2x32xf32>
    %20 = vector.multi_reduction <add>, %19, %cst_8 [1] : vector<2x8x32xf32> to vector<2x32xf32>
    %cst_9 = arith.constant 1.000000e+00 : f32
    %21 = vector.broadcast %cst_9 : f32 to vector<2x1xf32>
    %22 = arith.divf %21, %16 : vector<2x1xf32>
    %23 = vector.broadcast %22 : vector<2x1xf32> to vector<2x32xf32>
    %24 = arith.mulf %20, %23 : vector<2x32xf32>
    %c0_10 = arith.constant 0 : index
    %c0_11 = arith.constant 0 : index
    %25 = vector.load %arg4[%c0_10, %c0_11] : memref<2x32xf32, #tpu.memory_space<vmem>>, vector<2x32xf32>
    tpu.vector_store %arg4[%c0_10, %c0_11], %24 {strides = array<i32>} : memref<2x32xf32, #tpu.memory_space<vmem>>, vector<2x32xf32>,
    return
  }
  func.func @transform_0(%arg0: i32) -> (i32, i32, i32) {
    %c0_i32 = arith.constant 0 : i32
    %c0_i32_0 = arith.constant 0 : i32
    %c0_i32_1 = arith.constant 0 : i32
    return %arg0, %c0_i32, %c0_i32_0 : i32, i32, i32
  }
  func.func @transform_1(%arg0: i32) -> (i32, i32) {
    %c0_i32 = arith.constant 0 : i32
    %c0_i32_0 = arith.constant 0 : i32
    %c0_i32_1 = arith.constant 0 : i32
    return %c0_i32, %c0_i32_0 : i32, i32
  }
  func.func @transform_2(%arg0: i32) -> (i32, i32) {
    %c0_i32 = arith.constant 0 : i32
    %c0_i32_0 = arith.constant 0 : i32
    %c0_i32_1 = arith.constant 0 : i32
    return %c0_i32, %c0_i32_0 : i32, i32
  }
  func.func @transform_3(%arg0: i32) -> (i32, i32) {
    %c0_i32 = arith.constant 0 : i32
    %c0_i32_0 = arith.constant 0 : i32
    return %arg0, %c0_i32 : i32, i32
  }
}

</mosaic_0001>

<llo_original>
// kernel: tpu_custom_call.1
$region0: #{tpu_custom_call.1}
  #allocation0 [shape = 'u32[]', space=smem, size = 0x4, offset = 0x4, fixed_abs, tag = 'smem constant byte address 0x4 - core index']
  #allocation1 [shape = 'u32[144,128]{1,0:T(1,128)}', space=vmem, size = 0x12000, scoped, tag = 'internal scratch']
  #allocation2 [shape = 'f32[1,1]{1,0:T(1,128)S(1)}', space=vmem, size = 0x200, scoped, tag = 'scoped memory for tpu_custom_call.1']
  %s0 = inlined_call_operand.hbm [shape: f32[2,8,32], index: 0, kind: input, shape index: {}]
  %s1 = inlined_call_operand.vmem [shape: f32[1,32], index: 1, kind: input, shape index: {}]
  %s2 = inlined_call_operand.<no memory space> [shape: f32[1,1], index: 2, kind: input, shape index: {}]
  %s3 = inlined_call_operand.hbm [shape: f32[2,32], index: 3, kind: output, shape index: {}]
  %s4 = sld [smem:[#allocation0]]
  $region26: #{tpu_custom_call.1} parent=0
    _
  %s6 = ssub.s32 1, %s4
  %s7 = scalar_select 0, %s6, %s4
  %v8 = vstv %s2
  %9 = vst [vmem:[#allocation2] sm:$0x1] %v8
  $region1: #{tpu_custom_call.1} parent=0
    #allocation3 [shape = 'u8[8192]{0}', space=vmem, size = 0x2000, scoped, tag = 'input window, operand 0, single buffered']
    #allocation4 [shape = 's32[1]{0}', space=sflag, size = 0x4, scoped, tag = 'scoped memory for tpu_custom_call.1']
    #allocation5 [shape = 's32[1]{0}', space=sflag, size = 0x4, scoped, tag = 'scoped memory for tpu_custom_call.1']
    #allocation6 [shape = 'u8[1024]{0}', space=vmem, size = 0x400, scoped, tag = 'output window, operand 0, single buffered']
    %10 = vsyncpa [#allocation4], 0
    %11 = vsyncpa [#allocation5], 0
    // Predicated region
    $region2: #{tpu_custom_call.1} parent=1 // pred_check
      _
    $region3: #{tpu_custom_call.1} parent=1 // pred_check_branch
      %13 = sbr.rel (0) target = $region5
    $region4: #{tpu_custom_call.1} parent=1 // pred_region
      %s15 = ssub.s32 256, 256
      %16 = vsyncadd [#allocation4], %s15
      %s17 = sshll.u32 [#allocation3], 4
      %s18 = int_to_ptr.vmem [resolvable:$true] %s17
      %23 = dma.hbm_to_vmem [thread:$0]  %s0, 256, %s18, [#allocation4], 128, 128, 8
    $region5: #{tpu_custom_call.1} parent=1 // pred_fallthru
      _
    // Predicated region
    $region6: #{tpu_custom_call.1} parent=1 // pred_check
      _
    $region7: #{tpu_custom_call.1} parent=1 // pred_check_branch
      %25 = sbr.rel (0) target = $region9
    $region8: #{tpu_custom_call.1} parent=1 // pred_region
      _
    $region9: #{tpu_custom_call.1} parent=1 // pred_fallthru
      _
    // Predicated region
    $region10: #{tpu_custom_call.1} parent=1 // pred_check
      _
    $region11: #{tpu_custom_call.1} parent=1 // pred_check_branch
      %27 = sbr.rel (0) target = $region13
    $region12: #{tpu_custom_call.1} parent=1 // pred_region
      _
    $region13: #{tpu_custom_call.1} parent=1 // pred_fallthru
      _
    // Predicated region
    $region14: #{tpu_custom_call.1} parent=1 // pred_check
      _
    $region15: #{tpu_custom_call.1} parent=1 // pred_check_branch
      %29 = sbr.rel (0) target = $region17
    $region16: #{tpu_custom_call.1} parent=1 // pred_region
      %30 = dma.done [#allocation4], 256
    $region17: #{tpu_custom_call.1} parent=1 // pred_fallthru
      _
    %v31 = vld [vmem:[#allocation3] sm:$0xff]
    %v32 = vld [vmem:[#allocation3 + $0x8] sm:$0xff]
    %v33 = vld [vmem:[%s1] sm:$0x1]
    %v34 = vld [vmem:[#allocation2] sm:$0x1]
    %s35 = vtos %v34
    %v37 = vlaneseq
    %v38 = vshrl.u32 %v37, 7
    %v39 = vsub.s32 0, %v38
    %v40 = vrot.slane %v33, %v39
    %v42 = vmul.f32 %v31, %v40
    %v43 = vmul.f32 %v32, %v40
    %vm44 = vcmask 261120
    %v45 = vsel %vm44, %v42, 0.0
    %46 = vadd.xlane.f32.xlu0 %v45
    %v47 = vpop.xlane.xlu0 %46
    %v48 = vsel %vm44, %v43, 0.0
    %49 = vadd.xlane.f32.xlu0 %v48
    %v50 = vpop.xlane.xlu0 %49
    %v51 = vstv %s35
    %v52 = vadd.f32 %v47, %v51
    %v53 = vadd.f32 %v50, %v51
    %v56 = vlaneseq
    %v57 = vand.u32 %v56, 127
    %v58 = vlaneseq
    %v59 = vshrl.u32 %v58, 7
    %v60 = vsub.s32 %v57, %v59
    %v61 = vrot.slane %v52, %v60
    %v62 = vlaneseq
    %v63 = vshrl.u32 %v62, 7
    %v64 = vsub.s32 %v57, %v63
    %v65 = vrot.slane %v53, %v64
    %vm66 = vcmask 1041409
    %v67 = vsel %vm66, %v65, %v61
    %vm69 = vcmask 58368
    %v70 = vsel %vm69, %v67, -inf
    %71 = vmax.xlane.f32.xlu0 %v70
    %v72 = vpop.xlane.xlu0 %71
    %v74 = vlaneseq
    %v75 = vshrl.u32 %v74, 7
    %v76 = vsub.s32 0, %v75
    %v77 = vrot.slane %v72, %v76
    %v78 = vlaneseq
    %v79 = vshrl.u32 %v78, 7
    %v80 = vsub.s32 1, %v79
    %v81 = vrot.slane %v72, %v80
    %v84 = vsub.f32 %v52, %v77
    %v85 = vsub.f32 %v53, %v81
    %v86 = vmul.f32 %v84, 1.442695
    %v87 = vpow.pop %v86
    %v88 = vmul.f32 %v85, 1.442695
    %v89 = vpow.pop %v88
    %92 = vset.pattern.permute.xlu0 0
    %93 = vperm.xlu0 %92, %v87
    %v94 = vpop.permute.xlu0 %93
    %95 = vset.pattern.permute.xlu0 0
    %96 = vperm.xlu0 %95, %v89
    %v97 = vpop.permute.xlu0 %96
    %v98 = vlaneseq
    %v99 = vshrl.u32 %v98, 7
    %v100 = vsub.s32 %v57, %v99
    %v101 = vrot.slane %v94, %v100
    %v102 = vlaneseq
    %v103 = vshrl.u32 %v102, 7
    %v104 = vsub.s32 %v57, %v103
    %v105 = vrot.slane %v97, %v104
    %v106 = vsel %vm66, %v105, %v101
    %v108 = vsel %vm69, %v106, 0.0
    %109 = vadd.xlane.f32.xlu0 %v108
    %v110 = vpop.xlane.xlu0 %109
    %v113 = vmul.f32 %v94, %v31
    %v114 = vmul.f32 %v97, %v32
    %v115 = vsel %vm44, %v113, 0.0
    %v116 = vrot.slane %v115, 4
    %v117 = vadd.f32 %v115, %v116
    %v118 = vrot.slane %v117, 2
    %v119 = vadd.f32 %v117, %v118
    %v120 = vrot.slane %v119, 1
    %v121 = vadd.f32 %v119, %v120
    %v122 = vsel %vm44, %v114, 0.0
    %v123 = vrot.slane %v122, 4
    %v124 = vadd.f32 %v122, %v123
    %v125 = vrot.slane %v124, 2
    %v126 = vadd.f32 %v124, %v125
    %v127 = vrot.slane %v126, 1
    %v128 = vadd.f32 %v126, %v127
    %v129 = vrcp.pop %v110
    %v130 = vmul.f32 1.0, %v129
    %v132 = vrot.slane %v130, 1
    %v135 = vmul.f32 %v121, %v130
    %v136 = vmul.f32 %v128, %v132
    %v139 = vrot.slane %v136, 7
    %v140 = vsel %vm66, %v139, %v135
    %vm142 = vcmask 254976
    %143 = vst.msk [vmem:[#allocation6] sm:$0x3] %vm142, %v140
    // Predicated region
    $region18: #{tpu_custom_call.1} parent=1 // pred_check
      _
    $region19: #{tpu_custom_call.1} parent=1 // pred_check_branch
      %145 = sbr.rel (0) target = $region21
    $region20: #{tpu_custom_call.1} parent=1 // pred_region
      %s147 = ssub.s32 32, 32
      %148 = vsyncadd [#allocation5], %s147
      %s150 = sshll.u32 [#allocation6], 4
      %s151 = int_to_ptr.vmem [resolvable:$true] %s150
      %153 = dma.vmem_to_hbm [thread:$0]  %s151, 32, %s3, [#allocation5]
    $region21: #{tpu_custom_call.1} parent=1 // pred_fallthru
      _
    // Predicated region
    $region22: #{tpu_custom_call.1} parent=1 // pred_check
      _
    $region23: #{tpu_custom_call.1} parent=1 // pred_check_branch
      %155 = sbr.rel (0) target = $region25
    $region24: #{tpu_custom_call.1} parent=1 // pred_region
      %156 = dma.done [#allocation5], 32
    $region25: #{tpu_custom_call.1} parent=1 // pred_fallthru
      _
    %157 = vsyncpa [#allocation4], 1
    %158 = vsyncpa [#allocation5], 1

</llo_original>
